<compile_context>
chip_gen: v5e
topology: v5e:2x2
jax: 0.10.0
libtpu: 0.0.40
codegen_flags: <defaults>
</compile_context>

<pallas_src>
import math
import jax
import jax.numpy as jnp
from jax.experimental import pallas as pl
from jax.experimental.pallas import tpu as pltpu

H1, H2 = 400, 300          # logical hidden sizes (PyTorch module)
H1P, H2P = 512, 384        # lane-padded hidden sizes (multiples of 128)


def _round_up(x, m):
    return ((x + m - 1) // m) * m


def critic_kernel(s_ref, a_ref, w1s_ref, w1a_ref, b1_ref,
                  w2_ref, b2_ref, w3_ref, b3_ref, o_ref):
    # MXU matmuls take bf16 operands with f32 accumulation; VPU work stays f32.
    s = s_ref[...].astype(jnp.bfloat16)
    a = a_ref[...].astype(jnp.bfloat16)

    # Layer 1: fused concat -> split matmul (state and action parts of W1).
    h1 = (jnp.dot(s, w1s_ref[...], preferred_element_type=jnp.float32)
          + jnp.dot(a, w1a_ref[...], preferred_element_type=jnp.float32)
          + b1_ref[...])
    h1 = jnp.maximum(h1, 0.0)

    # Layer 2.
    h2 = jnp.dot(h1.astype(jnp.bfloat16), w2_ref[...],
                 preferred_element_type=jnp.float32) + b2_ref[...]
    h2 = jnp.maximum(h2, 0.0)

    # Layer 3 (output width 1): VPU multiply + lane reduce instead of an MXU
    # pass that would use <1% of the array.
    q = jnp.sum(h2 * w3_ref[...], axis=-1, keepdims=True) + b3_ref[...]
    o_ref[...] = q.astype(o_ref.dtype)


def init_critic_params(key, state_dim, action_dim):
    """PyTorch nn.Linear default init; weights stored (in, out)."""
    dims = [(state_dim + action_dim, H1), (H1, H2), (H2, 1)]
    params = []
    for fan_in, fan_out in dims:
        key, kw, kb = jax.random.split(key, 3)
        bound = 1.0 / math.sqrt(fan_in)
        w = jax.random.uniform(kw, (fan_in, fan_out), jnp.float32, -bound, bound)
        b = jax.random.uniform(kb, (1, fan_out), jnp.float32, -bound, bound)
        params.extend([w, b])
    return tuple(params)


def prepare_params(params, state_dim, action_dim):
    """Split W1 by input (state/action), zero-pad feature dims to 512/384,
    and cast the MXU-side weights to bf16 (biases / final row stay f32)."""
    w1, b1, w2, b2, w3, b3 = params
    w1p = jnp.zeros((state_dim + action_dim, H1P), jnp.float32).at[:, :H1].set(w1)
    w1s = w1p[:state_dim].astype(jnp.bfloat16)             # (sd, 512) bf16
    w1a = w1p[state_dim:].astype(jnp.bfloat16)              # (ad, 512) bf16
    b1p = jnp.zeros((1, H1P), jnp.float32).at[:, :H1].set(b1)
    w2p = (jnp.zeros((H1P, H2P), jnp.float32).at[:H1, :H2].set(w2)
           ).astype(jnp.bfloat16)                            # (512, 384) bf16
    b2p = jnp.zeros((1, H2P), jnp.float32).at[:, :H2].set(b2)
    w3row = jnp.zeros((1, H2P), jnp.float32).at[:, :H2].set(w3[:, 0])  # (1, 384) f32
    b3p = b3                                                 # (1, 1) f32
    return (w1s, w1a, b1p, w2p, b2p, w3row, b3p)


def critic_forward(state, action, prepared, *, tm=512):
    """state: (B, sd) f32, action: (B, ad) f32 -> (B, 1) f32."""
    w1s, w1a, b1, w2, b2, w3row, b3 = prepared
    B, sd = state.shape
    ad = action.shape[1]

    # Batch tiling: small batches use a single 8-row-aligned tile, large
    # batches use TM-row tiles pipelined over a "parallel" grid axis.
    b8 = _round_up(B, 8)
    TM = min(tm, b8)
    B_pad = _round_up(b8, TM)
    if B_pad != B:
        state = jnp.pad(state, ((0, B_pad - B), (0, 0)))
        action = jnp.pad(action, ((0, B_pad - B), (0, 0)))
    grid = (B_pad // TM,)

    full = lambda arr: pl.BlockSpec(arr.shape, lambda i: (0, 0))

    flops = 2 * B_pad * (sd * H1P + ad * H1P + H1P * H2P + H2P)
    bytes_accessed = (w1s.size + w1a.size + w2.size) * 2 \
        + (b1.size + b2.size + w3row.size + b3.size) * 4 \
        + B_pad * (sd + ad + 1) * 4

    out_pad = pl.pallas_call(
        critic_kernel,
        out_shape=jax.ShapeDtypeStruct((B_pad, 1), jnp.float32),
        grid=grid,
        in_specs=[
            pl.BlockSpec((TM, sd), lambda i: (i, 0)),
            pl.BlockSpec((TM, ad), lambda i: (i, 0)),
            full(w1s), full(w1a), full(b1),
            full(w2), full(b2),
            full(w3row), full(b3),
        ],
        out_specs=pl.BlockSpec((TM, 1), lambda i: (i, 0)),
        compiler_params=pltpu.CompilerParams(
            dimension_semantics=("parallel",)),
        cost_estimate=pl.CostEstimate(
            flops=int(flops), transcendentals=0,
            bytes_accessed=int(bytes_accessed)),
    )(state, action, w1s, w1a, b1, w2, b2, w3row, b3)

    return out_pad[:B]


def critic_reference_f32(state, action, params):
    w1, b1, w2, b2, w3, b3 = params
    x = jnp.concatenate([state, action], axis=1)
    h1 = jnp.maximum(x @ w1 + b1, 0.0)
    h2 = jnp.maximum(h1 @ w2 + b2, 0.0)
    return h2 @ w3 + b3


def critic_reference_bf16(state, action, params):
    # Same math with operands rounded to bf16 where the kernel feeds the MXU.
    w1, b1, w2, b2, w3, b3 = params
    rd = lambda t: t.astype(jnp.bfloat16).astype(jnp.float32)
    x = rd(jnp.concatenate([state, action], axis=1))
    h1 = jnp.maximum(x @ rd(w1) + b1, 0.0)
    h2 = jnp.maximum(rd(h1) @ rd(w2) + b2, 0.0)
    return h2 @ w3 + b3


if __name__ == "__main__":
    key = jax.random.PRNGKey(0)
    k_params, k_state, k_action = jax.random.split(key, 3)

    batch, state_dim, action_dim = 8, 16, 8
    params = init_critic_params(k_params, state_dim, action_dim)
    prepared = prepare_params(params, state_dim, action_dim)

    state = jax.random.normal(k_state, (batch, state_dim), jnp.float32)
    action = jax.random.normal(k_action, (batch, action_dim), jnp.float32)

    q = critic_forward(state, action, prepared)
    jax.block_until_ready(q)
    assert q.shape == (batch, 1)

    # Tight check vs a reference with identical bf16 rounding of MXU operands.
    q_bf16 = critic_reference_bf16(state, action, params)
    assert jnp.allclose(q, q_bf16, atol=1e-3, rtol=1e-3)

    # Loose check vs the exact f32 PyTorch-equivalent math.
    q_f32 = critic_reference_f32(state, action, params)
    assert jnp.allclose(q, q_f32, atol=5e-2, rtol=5e-2)

    print("KERNEL_OK")
</pallas_src>

<mosaic_0001>
module attributes {stable_mosaic.version = 11 : i64} {
  func.func @critic_kernel(%arg0: i32, %arg1: memref<8x16xf32, #tpu.memory_space<vmem>>, %arg2: memref<8x8xf32, #tpu.memory_space<vmem>>, %arg3: memref<16x512xbf16, #tpu.memory_space<vmem>>, %arg4: memref<8x512xbf16, #tpu.memory_space<vmem>>, %arg5: memref<1x512xf32, #tpu.memory_space<vmem>>, %arg6: memref<512x384xbf16, #tpu.memory_space<vmem>>, %arg7: memref<1x384xf32, #tpu.memory_space<vmem>>, %arg8: memref<1x384xf32, #tpu.memory_space<vmem>>, %arg9: memref<1x1xf32, #tpu.memory_space<vmem>>, %arg10: memref<8x1xf32, #tpu.memory_space<vmem>>) attributes {dimension_semantics = [#tpu.dimension_semantics<parallel>], iteration_bounds = array<i64: 1>, scalar_prefetch = 0 : i64, scratch_operands = 0 : i64, tpu.core_type = #tpu.core_type<tc>, window_params = [{transform_indices = @transform_0, window_bounds = array<i64: 8, 16>}, {transform_indices = @transform_1, window_bounds = array<i64: 8, 8>}, {pipeline_mode = #tpu.pipeline_mode<synchronous>, transform_indices = @transform_2, window_bounds = array<i64: 16, 512>}, {pipeline_mode = #tpu.pipeline_mode<synchronous>, transform_indices = @transform_3, window_bounds = array<i64: 8, 512>}, {pipeline_mode = #tpu.pipeline_mode<synchronous>, transform_indices = @transform_4, window_bounds = array<i64: 1, 512>}, {pipeline_mode = #tpu.pipeline_mode<synchronous>, transform_indices = @transform_5, window_bounds = array<i64: 512, 384>}, {pipeline_mode = #tpu.pipeline_mode<synchronous>, transform_indices = @transform_6, window_bounds = array<i64: 1, 384>}, {pipeline_mode = #tpu.pipeline_mode<synchronous>, transform_indices = @transform_7, window_bounds = array<i64: 1, 384>}, {pipeline_mode = #tpu.pipeline_mode<synchronous>, transform_indices = @transform_8, window_bounds = array<i64: 1, 1>}, {transform_indices = @transform_9, window_bounds = array<i64: 8, 1>}]} {
    %c0 = arith.constant 0 : index
    %c0_0 = arith.constant 0 : index
    %0 = vector.load %arg1[%c0, %c0_0] : memref<8x16xf32, #tpu.memory_space<vmem>>, vector<8x16xf32>
    %1 = arith.truncf %0 : vector<8x16xf32> to vector<8x16xbf16>
    %c0_1 = arith.constant 0 : index
    %c0_2 = arith.constant 0 : index
    %2 = vector.load %arg2[%c0_1, %c0_2] : memref<8x8xf32, #tpu.memory_space<vmem>>, vector<8x8xf32>
    %3 = arith.truncf %2 : vector<8x8xf32> to vector<8x8xbf16>
    %c0_3 = arith.constant 0 : index
    %c0_4 = arith.constant 0 : index
    %4 = vector.load %arg3[%c0_3, %c0_4] : memref<16x512xbf16, #tpu.memory_space<vmem>>, vector<16x512xbf16>
    %cst = arith.constant dense<0.000000e+00> : vector<8x512xf32>
    %5 = tpu.matmul %1, %4, %cst {dimension_numbers = #tpu.dot_dimension_numbers<[1], [0], [0], [1], [0, 0, 1, 1], [], []>} : vector<8x16xbf16>, vector<16x512xbf16>, vector<8x512xf32> -> vector<8x512xf32>
    %c0_5 = arith.constant 0 : index
    %c0_6 = arith.constant 0 : index
    %6 = vector.load %arg4[%c0_5, %c0_6] : memref<8x512xbf16, #tpu.memory_space<vmem>>, vector<8x512xbf16>
    %cst_7 = arith.constant dense<0.000000e+00> : vector<8x512xf32>
    %7 = tpu.matmul %3, %6, %cst_7 {dimension_numbers = #tpu.dot_dimension_numbers<[1], [0], [0], [1], [0, 0, 1, 1], [], []>} : vector<8x8xbf16>, vector<8x512xbf16>, vector<8x512xf32> -> vector<8x512xf32>
    %8 = arith.addf %5, %7 : vector<8x512xf32>
    %c0_8 = arith.constant 0 : index
    %c0_9 = arith.constant 0 : index
    %9 = vector.load %arg5[%c0_8, %c0_9] : memref<1x512xf32, #tpu.memory_space<vmem>>, vector<1x512xf32>
    %10 = vector.broadcast %9 : vector<1x512xf32> to vector<8x512xf32>
    %11 = arith.addf %8, %10 : vector<8x512xf32>
    %cst_10 = arith.constant 0.000000e+00 : f32
    %12 = vector.broadcast %cst_10 : f32 to vector<8x512xf32>
    %13 = arith.maximumf %11, %12 : vector<8x512xf32>
    %14 = arith.truncf %13 : vector<8x512xf32> to vector<8x512xbf16>
    %c0_11 = arith.constant 0 : index
    %c0_12 = arith.constant 0 : index
    %15 = vector.load %arg6[%c0_11, %c0_12] : memref<512x384xbf16, #tpu.memory_space<vmem>>, vector<512x384xbf16>
    %cst_13 = arith.constant dense<0.000000e+00> : vector<8x384xf32>
    %16 = tpu.matmul %14, %15, %cst_13 {dimension_numbers = #tpu.dot_dimension_numbers<[1], [0], [0], [1], [0, 0, 1, 1], [], []>} : vector<8x512xbf16>, vector<512x384xbf16>, vector<8x384xf32> -> vector<8x384xf32>
    %c0_14 = arith.constant 0 : index
    %c0_15 = arith.constant 0 : index
    %17 = vector.load %arg7[%c0_14, %c0_15] : memref<1x384xf32, #tpu.memory_space<vmem>>, vector<1x384xf32>
    %18 = vector.broadcast %17 : vector<1x384xf32> to vector<8x384xf32>
    %19 = arith.addf %16, %18 : vector<8x384xf32>
    %cst_16 = arith.constant 0.000000e+00 : f32
    %20 = vector.broadcast %cst_16 : f32 to vector<8x384xf32>
    %21 = arith.maximumf %19, %20 : vector<8x384xf32>
    %c0_17 = arith.constant 0 : index
    %c0_18 = arith.constant 0 : index
    %22 = vector.load %arg8[%c0_17, %c0_18] : memref<1x384xf32, #tpu.memory_space<vmem>>, vector<1x384xf32>
    %23 = vector.broadcast %22 : vector<1x384xf32> to vector<8x384xf32>
    %24 = arith.mulf %21, %23 : vector<8x384xf32>
    %cst_19 = arith.constant dense<0.000000e+00> : vector<8xf32>
    %25 = vector.multi_reduction <add>, %24, %cst_19 [1] : vector<8x384xf32> to vector<8xf32>
    %26 = vector.shape_cast %25 : vector<8xf32> to vector<8x1xf32>
    %c0_20 = arith.constant 0 : index
    %c0_21 = arith.constant 0 : index
    %27 = vector.load %arg9[%c0_20, %c0_21] : memref<1x1xf32, #tpu.memory_space<vmem>>, vector<1x1xf32>
    %28 = vector.broadcast %27 : vector<1x1xf32> to vector<8x1xf32>
    %29 = arith.addf %26, %28 : vector<8x1xf32>
    %c0_22 = arith.constant 0 : index
    %c0_23 = arith.constant 0 : index
    %30 = vector.load %arg10[%c0_22, %c0_23] : memref<8x1xf32, #tpu.memory_space<vmem>>, vector<8x1xf32>
    tpu.vector_store %arg10[%c0_22, %c0_23], %29 {strides = array<i32>} : memref<8x1xf32, #tpu.memory_space<vmem>>, vector<8x1xf32>,
    return
  }
  func.func @transform_0(%arg0: i32) -> (i32, i32) {
    %c0_i32 = arith.constant 0 : i32
    %c0_i32_0 = arith.constant 0 : i32
    return %arg0, %c0_i32 : i32, i32
  }
  func.func @transform_1(%arg0: i32) -> (i32, i32) {
    %c0_i32 = arith.constant 0 : i32
    %c0_i32_0 = arith.constant 0 : i32
    return %arg0, %c0_i32 : i32, i32
  }
  func.func @transform_2(%arg0: i32) -> (i32, i32) {
    %c0_i32 = arith.constant 0 : i32
    %c0_i32_0 = arith.constant 0 : i32
    %c0_i32_1 = arith.constant 0 : i32
    return %c0_i32, %c0_i32_0 : i32, i32
  }
  func.func @transform_3(%arg0: i32) -> (i32, i32) {
    %c0_i32 = arith.constant 0 : i32
    %c0_i32_0 = arith.constant 0 : i32
    %c0_i32_1 = arith.constant 0 : i32
    return %c0_i32, %c0_i32_0 : i32, i32
  }
  func.func @transform_4(%arg0: i32) -> (i32, i32) {
    %c0_i32 = arith.constant 0 : i32
    %c0_i32_0 = arith.constant 0 : i32
    %c0_i32_1 = arith.constant 0 : i32
    return %c0_i32, %c0_i32_0 : i32, i32
  }
  func.func @transform_5(%arg0: i32) -> (i32, i32) {
    %c0_i32 = arith.constant 0 : i32
    %c0_i32_0 = arith.constant 0 : i32
    %c0_i32_1 = arith.constant 0 : i32
    return %c0_i32, %c0_i32_0 : i32, i32
  }
  func.func @transform_6(%arg0: i32) -> (i32, i32) {
    %c0_i32 = arith.constant 0 : i32
    %c0_i32_0 = arith.constant 0 : i32
    %c0_i32_1 = arith.constant 0 : i32
    return %c0_i32, %c0_i32_0 : i32, i32
  }
  func.func @transform_7(%arg0: i32) -> (i32, i32) {
    %c0_i32 = arith.constant 0 : i32
    %c0_i32_0 = arith.constant 0 : i32
    %c0_i32_1 = arith.constant 0 : i32
    return %c0_i32, %c0_i32_0 : i32, i32
  }
  func.func @transform_8(%arg0: i32) -> (i32, i32) {
    %c0_i32 = arith.constant 0 : i32
    %c0_i32_0 = arith.constant 0 : i32
    %c0_i32_1 = arith.constant 0 : i32
    return %c0_i32, %c0_i32_0 : i32, i32
  }
  func.func @transform_9(%arg0: i32) -> (i32, i32) {
    %c0_i32 = arith.constant 0 : i32
    %c0_i32_0 = arith.constant 0 : i32
    return %arg0, %c0_i32 : i32, i32
  }
}

</mosaic_0001>

<llo_original>
// kernel: tpu_custom_call.1
$region0: #{tpu_custom_call.1}
  #allocation0 [shape = 'u32[]', space=smem, size = 0x4, offset = 0x4, fixed_abs, tag = 'smem constant byte address 0x4 - core index']
  #allocation1 [shape = 'u32[72,128]{1,0:T(1,128)}', space=vmem, size = 0x9000, scoped, tag = 'internal scratch']
  #allocation2 [shape = 'f32[1,1]{1,0:T(1,128)S(1)}', space=vmem, size = 0x200, scoped, tag = 'scoped memory for tpu_custom_call.1']
  %s0 = inlined_call_operand.hbm [shape: f32[8,16], index: 0, kind: input, shape index: {}]
  %s1 = inlined_call_operand.hbm [shape: f32[8,8], index: 1, kind: input, shape index: {}]
  %s2 = inlined_call_operand.hbm [shape: bf16[16,512], index: 2, kind: input, shape index: {}]
  %s3 = inlined_call_operand.hbm [shape: bf16[8,512], index: 3, kind: input, shape index: {}]
  %s4 = inlined_call_operand.vmem [shape: f32[1,512], index: 4, kind: input, shape index: {}]
  %s5 = inlined_call_operand.hbm [shape: bf16[512,384], index: 5, kind: input, shape index: {}]
  %s6 = inlined_call_operand.vmem [shape: f32[1,384], index: 6, kind: input, shape index: {}]
  %s7 = inlined_call_operand.hbm [shape: f32[1,384], index: 7, kind: input, shape index: {}]
  %s8 = inlined_call_operand.<no memory space> [shape: f32[1,1], index: 8, kind: input, shape index: {}]
  %s9 = inlined_call_operand.vmem [shape: f32[8,1], index: 9, kind: output, shape index: {}]
  %s10 = sld [smem:[#allocation0]]
  $region70: #{tpu_custom_call.1} parent=0
    _
  %s12 = ssub.s32 1, %s10
  %s13 = scalar_select 0, %s12, %s10
  %v14 = vstv %s8
  %15 = vst [vmem:[#allocation2] sm:$0x1] %v14
  $region1: #{tpu_custom_call.1} parent=0
    #allocation3 [shape = 'u8[4096]{0}', space=vmem, size = 0x1000, scoped, tag = 'input window, operand 0, single buffered']
    #allocation4 [shape = 's32[1]{0}', space=sflag, size = 0x4, scoped, tag = 'scoped memory for tpu_custom_call.1']
    #allocation5 [shape = 'u8[4096]{0}', space=vmem, size = 0x1000, scoped, tag = 'input window, operand 1, single buffered']
    #allocation6 [shape = 's32[1]{0}', space=sflag, size = 0x4, scoped, tag = 'scoped memory for tpu_custom_call.1']
    #allocation7 [shape = 'u8[16384]{0}', space=vmem, size = 0x4000, scoped, tag = 'input window, operand 2, single buffered']
    #allocation8 [shape = 'u8[8192]{0}', space=vmem, size = 0x2000, scoped, tag = 'input window, operand 3, single buffered']
    #allocation9 [shape = 's32[1]{0}', space=sflag, size = 0x4, scoped, tag = 'scoped memory for tpu_custom_call.1']
    #allocation10 [shape = 'u8[393216]{0}', space=vmem, size = 0x60000, scoped, tag = 'input window, operand 5, single buffered']
    #allocation11 [shape = 'u8[1536]{0}', space=vmem, size = 0x800, scoped, tag = 'input window, operand 7, single buffered']
    #allocation12 [shape = 's32[1]{0}', space=sflag, size = 0x4, scoped, tag = 'scoped memory for tpu_custom_call.1']
    %16 = vsyncpa [#allocation4], 0
    %17 = vsyncpa [#allocation6], 0
    %18 = vsyncpa [#allocation9], 0
    %19 = vsyncpa [#allocation12], 0
    // Predicated region
    $region2: #{tpu_custom_call.1} parent=1 // pred_check
      _
    $region3: #{tpu_custom_call.1} parent=1 // pred_check_branch
      %21 = sbr.rel (0) target = $region5
    $region4: #{tpu_custom_call.1} parent=1 // pred_region
      %23 = vsyncadd [#allocation4], 0
      %s25 = sshll.u32 %s0, 4
      %s26 = int_to_ptr.hbm [resolvable:$true] %s25
      %s27 = sshll.u32 [#allocation3], 4
      %s28 = int_to_ptr.vmem [resolvable:$true] %s27
      %30 = dma.hbm_to_vmem [thread:$0]  %s26, 128, %s28, [#allocation4]
    $region5: #{tpu_custom_call.1} parent=1 // pred_fallthru
      _
    // Predicated region
    $region6: #{tpu_custom_call.1} parent=1 // pred_check
      _
    $region7: #{tpu_custom_call.1} parent=1 // pred_check_branch
      %32 = sbr.rel (0) target = $region9
    $region8: #{tpu_custom_call.1} parent=1 // pred_region
      %34 = vsyncadd [#allocation6], 0
      %s36 = sshll.u32 %s1, 4
      %s37 = int_to_ptr.hbm [resolvable:$true] %s36
      %s38 = sshll.u32 [#allocation5], 4
      %s39 = int_to_ptr.vmem [resolvable:$true] %s38
      %41 = dma.hbm_to_vmem [thread:$0]  %s37, 128, %s39, [#allocation6]
    $region9: #{tpu_custom_call.1} parent=1 // pred_fallthru
      _
    // Predicated region
    $region10: #{tpu_custom_call.1} parent=1 // pred_check
      _
    $region11: #{tpu_custom_call.1} parent=1 // pred_check_branch
      %43 = sbr.rel (0) target = $region13
    $region12: #{tpu_custom_call.1} parent=1 // pred_region
      %45 = vsyncadd [#allocation6], 0
      %s46 = sshll.u32 %s2, 4
      %s47 = int_to_ptr.hbm [resolvable:$true] %s46
      %s48 = sshll.u32 [#allocation7], 4
      %s49 = int_to_ptr.vmem [resolvable:$true] %s48
      %54 = dma.hbm_to_vmem [thread:$0]  %s47, 512, %s49, [#allocation6], 256, 256, 16
    $region13: #{tpu_custom_call.1} parent=1 // pred_fallthru
      _
    // Predicated region
    $region14: #{tpu_custom_call.1} parent=1 // pred_check
      _
    $region15: #{tpu_custom_call.1} parent=1 // pred_check_branch
      %56 = sbr.rel (0) target = $region17
    $region16: #{tpu_custom_call.1} parent=1 // pred_region
      %58 = vsyncadd [#allocation9], 0
      %s60 = sshll.u32 %s3, 4
      %s61 = int_to_ptr.hbm [resolvable:$true] %s60
      %s62 = sshll.u32 [#allocation8], 4
      %s63 = int_to_ptr.vmem [resolvable:$true] %s62
      %65 = dma.hbm_to_vmem [thread:$0]  %s61, 256, %s63, [#allocation9]
    $region17: #{tpu_custom_call.1} parent=1 // pred_fallthru
      _
    // Predicated region
    $region18: #{tpu_custom_call.1} parent=1 // pred_check
      _
    $region19: #{tpu_custom_call.1} parent=1 // pred_check_branch
      %67 = sbr.rel (0) target = $region21
    $region20: #{tpu_custom_call.1} parent=1 // pred_region
      _
    $region21: #{tpu_custom_call.1} parent=1 // pred_fallthru
      _
    // Predicated region
    $region22: #{tpu_custom_call.1} parent=1 // pred_check
      _
    $region23: #{tpu_custom_call.1} parent=1 // pred_check_branch
      %69 = sbr.rel (0) target = $region25
    $region24: #{tpu_custom_call.1} parent=1 // pred_region
      %71 = vsyncadd [#allocation9], 0
      %s72 = sshll.u32 %s5, 4
      %s73 = int_to_ptr.hbm [resolvable:$true] %s72
      %s74 = sshll.u32 [#allocation10], 4
      %s75 = int_to_ptr.vmem [resolvable:$true] %s74
      %80 = dma.hbm_to_vmem [thread:$0]  %s73, 12288, %s75, [#allocation9], 192, 192, 12
    $region25: #{tpu_custom_call.1} parent=1 // pred_fallthru
      _
    // Predicated region
    $region26: #{tpu_custom_call.1} parent=1 // pred_check
      _
    $region27: #{tpu_custom_call.1} parent=1 // pred_check_branch
      %82 = sbr.rel (0) target = $region29
    $region28: #{tpu_custom_call.1} parent=1 // pred_region
      _
    $region29: #{tpu_custom_call.1} parent=1 // pred_fallthru
      _
    // Predicated region
    $region30: #{tpu_custom_call.1} parent=1 // pred_check
      _
    $region31: #{tpu_custom_call.1} parent=1 // pred_check_branch
      %84 = sbr.rel (0) target = $region33
    $region32: #{tpu_custom_call.1} parent=1 // pred_region
      %86 = vsyncadd [#allocation12], 0
      %s88 = sshll.u32 %s7, 4
      %s89 = int_to_ptr.hbm [resolvable:$true] %s88
      %s90 = sshll.u32 [#allocation11], 4
      %s91 = int_to_ptr.vmem [resolvable:$true] %s90
      %93 = dma.hbm_to_vmem [thread:$0]  %s89, 48, %s91, [#allocation12]
    $region33: #{tpu_custom_call.1} parent=1 // pred_fallthru
      _
    // Predicated region
    $region34: #{tpu_custom_call.1} parent=1 // pred_check
      _
    $region35: #{tpu_custom_call.1} parent=1 // pred_check_branch
      %95 = sbr.rel (0) target = $region37
    $region36: #{tpu_custom_call.1} parent=1 // pred_region
      _
    $region37: #{tpu_custom_call.1} parent=1 // pred_fallthru
      _
    // Predicated region
    $region38: #{tpu_custom_call.1} parent=1 // pred_check
      _
    $region39: #{tpu_custom_call.1} parent=1 // pred_check_branch
      %97 = sbr.rel (0) target = $region41
    $region40: #{tpu_custom_call.1} parent=1 // pred_region
      %99 = dma.done [#allocation4], 128
    $region41: #{tpu_custom_call.1} parent=1 // pred_fallthru
      _
    // Predicated region
    $region42: #{tpu_custom_call.1} parent=1 // pred_check
      _
    $region43: #{tpu_custom_call.1} parent=1 // pred_check_branch
      %101 = sbr.rel (0) target = $region45
    $region44: #{tpu_custom_call.1} parent=1 // pred_region
      %103 = dma.done [#allocation6], 128
    $region45: #{tpu_custom_call.1} parent=1 // pred_fallthru
      _
    // Predicated region
    $region46: #{tpu_custom_call.1} parent=1 // pred_check
      _
    $region47: #{tpu_custom_call.1} parent=1 // pred_check_branch
      %105 = sbr.rel (0) target = $region49
    $region48: #{tpu_custom_call.1} parent=1 // pred_region
      %107 = dma.done [#allocation6], 512
    $region49: #{tpu_custom_call.1} parent=1 // pred_fallthru
      _
    // Predicated region
    $region50: #{tpu_custom_call.1} parent=1 // pred_check
      _
    $region51: #{tpu_custom_call.1} parent=1 // pred_check_branch
      %109 = sbr.rel (0) target = $region53
    $region52: #{tpu_custom_call.1} parent=1 // pred_region
      %111 = dma.done [#allocation9], 256
    $region53: #{tpu_custom_call.1} parent=1 // pred_fallthru
      _
    // Predicated region
    $region54: #{tpu_custom_call.1} parent=1 // pred_check
      _
    $region55: #{tpu_custom_call.1} parent=1 // pred_check_branch
      %113 = sbr.rel (0) target = $region57
    $region56: #{tpu_custom_call.1} parent=1 // pred_region
      %115 = dma.done [#allocation9], 12288
    $region57: #{tpu_custom_call.1} parent=1 // pred_fallthru
      _
    // Predicated region
    $region58: #{tpu_custom_call.1} parent=1 // pred_check
      _
    $region59: #{tpu_custom_call.1} parent=1 // pred_check_branch
      %117 = sbr.rel (0) target = $region61
    $region60: #{tpu_custom_call.1} parent=1 // pred_region
      %119 = dma.done [#allocation12], 48
    $region61: #{tpu_custom_call.1} parent=1 // pred_fallthru
      _
    %v121 = vld [vmem:[#allocation3] sm:$0xff]
    %v122 = vpack.c.bf16 %v121, %v121
    %v123 = vld [vmem:[#allocation5] sm:$0xff]
    %v124 = vpack.c.bf16 %v123, %v123
    %v125 = vld [vmem:[#allocation7] sm:$0xff]
    %v126 = vld [vmem:[#allocation7 + $0x8] sm:$0xff]
    %v127 = vld [vmem:[#allocation7 + $0x10] sm:$0xff]
    %v128 = vld [vmem:[#allocation7 + $0x18] sm:$0xff]
    %v129 = vld [vmem:[#allocation8] sm:$0xff]
    %v130 = vld [vmem:[#allocation8 + $0x8] sm:$0xff]
    %v133 = vunpack.c.l.b16 %v129
    %v134 = vunpack.c.h.b16 %v129
    %v135 = vunpack.c.l.b16 %v130
    %v136 = vunpack.c.h.b16 %v130
    %v137 = vpack.c.b16 %v133, %v133
    %v138 = vpack.c.b16 %v134, %v134
    %v139 = vpack.c.b16 %v135, %v135
    %v140 = vpack.c.b16 %v136, %v136
    %vm141 = vcmask 64512
    %v143 = vsel %vm141, %v124, 0
    %vm145 = vcmask 1043456
    %v147 = vsel %vm145, %v137, 0
    %v150 = vsel %vm145, %v138, 0
    %v153 = vsel %vm145, %v139, 0
    %v156 = vsel %vm145, %v140, 0
    %158 = vmatpush.bf16.msra.mxu0 0
    %159 = vmatpush.bf16.msra.mxu0 0
    %160 = vmatpush.bf16.msra.mxu0 0
    %161 = vmatpush.bf16.msra.mxu0 0
    %162 = vmatpush.bf16.msra.mxu0 0
    %163 = vmatpush.bf16.msra.mxu0 0
    %164 = vmatpush.bf16.msra.mxu0 0
    %165 = vmatpush.bf16.msra.mxu0 %v147
    %166 = vmatmul.bf16.gmra.mxu0 %v143
    %v167 = vpop.f32.mrf.mxu0
    %v168 = vadd.f32 0.0, %v167
    %v169 = vpop.f32.mrf.mxu0
    %170 = vdwg.mxu0
    %171 = vmatpush.bf16.msra.mxu0 0
    %172 = vmatpush.bf16.msra.mxu0 0
    %173 = vmatpush.bf16.msra.mxu0 0
    %174 = vmatpush.bf16.msra.mxu0 0
    %175 = vmatpush.bf16.msra.mxu0 0
    %176 = vmatpush.bf16.msra.mxu0 0
    %177 = vmatpush.bf16.msra.mxu0 0
    %178 = vmatpush.bf16.msra.mxu0 %v150
    %179 = vmatmul.bf16.gmra.mxu0 %v143
    %v180 = vpop.f32.mrf.mxu0
    %v181 = vadd.f32 0.0, %v180
    %v182 = vpop.f32.mrf.mxu0
    %183 = vdwg.mxu0
    %184 = vmatpush.bf16.msra.mxu0 0
    %185 = vmatpush.bf16.msra.mxu0 0
    %186 = vmatpush.bf16.msra.mxu0 0
    %187 = vmatpush.bf16.msra.mxu0 0
    %188 = vmatpush.bf16.msra.mxu0 0
    %189 = vmatpush.bf16.msra.mxu0 0
    %190 = vmatpush.bf16.msra.mxu0 0
    %191 = vmatpush.bf16.msra.mxu0 %v153
    %192 = vmatmul.bf16.gmra.mxu0 %v143
    %v193 = vpop.f32.mrf.mxu0
    %v194 = vadd.f32 0.0, %v193
    %v195 = vpop.f32.mrf.mxu0
    %196 = vdwg.mxu0
    %197 = vmatpush.bf16.msra.mxu0 0
    %198 = vmatpush.bf16.msra.mxu0 0
    %199 = vmatpush.bf16.msra.mxu0 0
    %200 = vmatpush.bf16.msra.mxu0 0
    %201 = vmatpush.bf16.msra.mxu0 0
    %202 = vmatpush.bf16.msra.mxu0 0
    %203 = vmatpush.bf16.msra.mxu0 0
    %204 = vmatpush.bf16.msra.mxu0 %v156
    %205 = vmatmul.bf16.gmra.mxu0 %v143
    %v206 = vpop.f32.mrf.mxu0
    %v207 = vadd.f32 0.0, %v206
    %v208 = vpop.f32.mrf.mxu0
    %209 = vdwg.mxu0
    %v214 = vunpack.c.l.b16 %v125
    %v215 = vunpack.c.h.b16 %v125
    %v216 = vunpack.c.l.b16 %v126
    %v217 = vunpack.c.h.b16 %v126
    %v218 = vunpack.c.l.b16 %v127
    %v219 = vunpack.c.h.b16 %v127
    %v220 = vunpack.c.l.b16 %v128
    %v221 = vunpack.c.h.b16 %v128
    %v222 = vpack.c.b16 %v218, %v214
    %v223 = vpack.c.b16 %v219, %v215
    %v224 = vpack.c.b16 %v220, %v216
    %v225 = vpack.c.b16 %v221, %v217
    %vm230 = vcmask 130048
    %v232 = vsel %vm230, %v122, 0
    %234 = vmatpush.bf16.msra.mxu0 0
    %235 = vmatpush.bf16.msra.mxu0 0
    %236 = vmatpush.bf16.msra.mxu0 0
    %237 = vmatpush.bf16.msra.mxu0 0
    %238 = vmatpush.bf16.msra.mxu0 0
    %239 = vmatpush.bf16.msra.mxu0 0
    %240 = vmatpush.bf16.msra.mxu0 0
    %241 = vmatpush.bf16.msra.mxu0 %v222
    %242 = vmatmul.bf16.gmra.mxu0 %v232
    %v243 = vpop.f32.mrf.mxu0
    %v244 = vadd.f32 %v168, %v243
    %v245 = vpop.f32.mrf.mxu0
    %246 = vdwg.mxu0
    %247 = vmatpush.bf16.msra.mxu0 0
    %248 = vmatpush.bf16.msra.mxu0 0
    %249 = vmatpush.bf16.msra.mxu0 0
    %250 = vmatpush.bf16.msra.mxu0 0
    %251 = vmatpush.bf16.msra.mxu0 0
    %252 = vmatpush.bf16.msra.mxu0 0
    %253 = vmatpush.bf16.msra.mxu0 0
    %254 = vmatpush.bf16.msra.mxu0 %v223
    %255 = vmatmul.bf16.gmra.mxu0 %v232
    %v256 = vpop.f32.mrf.mxu0
    %v257 = vadd.f32 %v181, %v256
    %v258 = vpop.f32.mrf.mxu0
    %259 = vdwg.mxu0
    %260 = vmatpush.bf16.msra.mxu0 0
    %261 = vmatpush.bf16.msra.mxu0 0
    %262 = vmatpush.bf16.msra.mxu0 0
    %263 = vmatpush.bf16.msra.mxu0 0
    %264 = vmatpush.bf16.msra.mxu0 0
    %265 = vmatpush.bf16.msra.mxu0 0
    %266 = vmatpush.bf16.msra.mxu0 0
    %267 = vmatpush.bf16.msra.mxu0 %v224
    %268 = vmatmul.bf16.gmra.mxu0 %v232
    %v269 = vpop.f32.mrf.mxu0
    %v270 = vadd.f32 %v194, %v269
    %v271 = vpop.f32.mrf.mxu0
    %272 = vdwg.mxu0
    %273 = vmatpush.bf16.msra.mxu0 0
    %274 = vmatpush.bf16.msra.mxu0 0
    %275 = vmatpush.bf16.msra.mxu0 0
    %276 = vmatpush.bf16.msra.mxu0 0
    %277 = vmatpush.bf16.msra.mxu0 0
    %278 = vmatpush.bf16.msra.mxu0 0
    %279 = vmatpush.bf16.msra.mxu0 0
    %280 = vmatpush.bf16.msra.mxu0 %v225
    %281 = vmatmul.bf16.gmra.mxu0 %v232
    %v282 = vpop.f32.mrf.mxu0
    %v283 = vadd.f32 %v207, %v282
    %v284 = vpop.f32.mrf.mxu0
    %285 = vdwg.mxu0
    %v286 = vld [vmem:[%s4] sm:$0xf]
    %v288 = vperm.slane %v286, 0
    %v289 = vperm.slane %v286, 1
    %v290 = vperm.slane %v286, 2
    %v291 = vperm.slane %v286, 3
    %v296 = vadd.f32 %v244, %v288
    %v297 = vadd.f32 %v257, %v289
    %v298 = vadd.f32 %v270, %v290
    %v299 = vadd.f32 %v283, %v291
    %v300 = vmax.f32 %v296, 0.0
    %v301 = vmax.f32 %v297, 0.0
    %v302 = vmax.f32 %v298, 0.0
    %v303 = vmax.f32 %v299, 0.0
    %v304 = vpack.c.bf16 %v300, %v300
    %v305 = vpack.c.bf16 %v301, %v301
    %v306 = vpack.c.bf16 %v302, %v302
    %v307 = vpack.c.bf16 %v303, %v303
    %v308 = vld [vmem:[#allocation10] sm:$0xff]
    %v309 = vld [vmem:[#allocation10 + $0x8] sm:$0xf]
    %v310 = vld [vmem:[#allocation10 + $0xc] sm:$0xff]
    %v311 = vld [vmem:[#allocation10 + $0x14] sm:$0xf]
    %v312 = vld [vmem:[#allocation10 + $0x18] sm:$0xff]
    %v313 = vld [vmem:[#allocation10 + $0x20] sm:$0xf]
    %v314 = vld [vmem:[#allocation10 + $0x24] sm:$0xff]
    %v315 = vld [vmem:[#allocation10 + $0x2c] sm:$0xf]
    %v316 = vld [vmem:[#allocation10 + $0x30] sm:$0xff]
    %v317 = vld [vmem:[#allocation10 + $0x38] sm:$0xf]
    %v318 = vld [vmem:[#allocation10 + $0x3c] sm:$0xff]
    %v319 = vld [vmem:[#allocation10 + $0x44] sm:$0xf]
    %v320 = vld [vmem:[#allocation10 + $0x48] sm:$0xff]
    %v321 = vld [vmem:[#allocation10 + $0x50] sm:$0xf]
    %v322 = vld [vmem:[#allocation10 + $0x54] sm:$0xff]
    %v323 = vld [vmem:[#allocation10 + $0x5c] sm:$0xf]
    %v324 = vld [vmem:[#allocation10 + $0x60] sm:$0xff]
    %v325 = vld [vmem:[#allocation10 + $0x68] sm:$0xf]
    %v326 = vld [vmem:[#allocation10 + $0x6c] sm:$0xff]
    %v327 = vld [vmem:[#allocation10 + $0x74] sm:$0xf]
    %v328 = vld [vmem:[#allocation10 + $0x78] sm:$0xff]
    %v329 = vld [vmem:[#allocation10 + $0x80] sm:$0xf]
    %v330 = vld [vmem:[#allocation10 + $0x84] sm:$0xff]
    %v331 = vld [vmem:[#allocation10 + $0x8c] sm:$0xf]
    %v332 = vld [vmem:[#allocation10 + $0x90] sm:$0xff]
    %v333 = vld [vmem:[#allocation10 + $0x98] sm:$0xf]
    %v334 = vld [vmem:[#allocation10 + $0x9c] sm:$0xff]
    %v335 = vld [vmem:[#allocation10 + $0xa4] sm:$0xf]
    %v336 = vld [vmem:[#allocation10 + $0xa8] sm:$0xff]
    %v337 = vld [vmem:[#allocation10 + $0xb0] sm:$0xf]
    %v338 = vld [vmem:[#allocation10 + $0xb4] sm:$0xff]
    %v339 = vld [vmem:[#allocation10 + $0xbc] sm:$0xf]
    %v340 = vld [vmem:[#allocation10 + $0xc0] sm:$0xff]
    %v341 = vld [vmem:[#allocation10 + $0xc8] sm:$0xf]
    %v342 = vld [vmem:[#allocation10 + $0xcc] sm:$0xff]
    %v343 = vld [vmem:[#allocation10 + $0xd4] sm:$0xf]
    %v344 = vld [vmem:[#allocation10 + $0xd8] sm:$0xff]
    %v345 = vld [vmem:[#allocation10 + $0xe0] sm:$0xf]
    %v346 = vld [vmem:[#allocation10 + $0xe4] sm:$0xff]
    %v347 = vld [vmem:[#allocation10 + $0xec] sm:$0xf]
    %v348 = vld [vmem:[#allocation10 + $0xf0] sm:$0xff]
    %v349 = vld [vmem:[#allocation10 + $0xf8] sm:$0xf]
    %v350 = vld [vmem:[#allocation10 + $0xfc] sm:$0xff]
    %v351 = vld [vmem:[#allocation10 + $0x104] sm:$0xf]
    %v352 = vld [vmem:[#allocation10 + $0x108] sm:$0xff]
    %v353 = vld [vmem:[#allocation10 + $0x110] sm:$0xf]
    %v354 = vld [vmem:[#allocation10 + $0x114] sm:$0xff]
    %v355 = vld [vmem:[#allocation10 + $0x11c] sm:$0xf]
    %v356 = vld [vmem:[#allocation10 + $0x120] sm:$0xff]
    %v357 = vld [vmem:[#allocation10 + $0x128] sm:$0xf]
    %v358 = vld [vmem:[#allocation10 + $0x12c] sm:$0xff]
    %v359 = vld [vmem:[#allocation10 + $0x134] sm:$0xf]
    %v360 = vld [vmem:[#allocation10 + $0x138] sm:$0xff]
    %v361 = vld [vmem:[#allocation10 + $0x140] sm:$0xf]
    %v362 = vld [vmem:[#allocation10 + $0x144] sm:$0xff]
    %v363 = vld [vmem:[#allocation10 + $0x14c] sm:$0xf]
    %v364 = vld [vmem:[#allocation10 + $0x150] sm:$0xff]
    %v365 = vld [vmem:[#allocation10 + $0x158] sm:$0xf]
    %v366 = vld [vmem:[#allocation10 + $0x15c] sm:$0xff]
    %v367 = vld [vmem:[#allocation10 + $0x164] sm:$0xf]
    %v368 = vld [vmem:[#allocation10 + $0x168] sm:$0xff]
    %v369 = vld [vmem:[#allocation10 + $0x170] sm:$0xf]
    %v370 = vld [vmem:[#allocation10 + $0x174] sm:$0xff]
    %v371 = vld [vmem:[#allocation10 + $0x17c] sm:$0xf]
    %v372 = vld [vmem:[#allocation10 + $0x180] sm:$0xff]
    %v373 = vld [vmem:[#allocation10 + $0x188] sm:$0xf]
    %v374 = vld [vmem:[#allocation10 + $0x18c] sm:$0xff]
    %v375 = vld [vmem:[#allocation10 + $0x194] sm:$0xf]
    %v376 = vld [vmem:[#allocation10 + $0x198] sm:$0xff]
    %v377 = vld [vmem:[#allocation10 + $0x1a0] sm:$0xf]
    %v378 = vld [vmem:[#allocation10 + $0x1a4] sm:$0xff]
    %v379 = vld [vmem:[#allocation10 + $0x1ac] sm:$0xf]
    %v380 = vld [vmem:[#allocation10 + $0x1b0] sm:$0xff]
    %v381 = vld [vmem:[#allocation10 + $0x1b8] sm:$0xf]
    %v382 = vld [vmem:[#allocation10 + $0x1bc] sm:$0xff]
    %v383 = vld [vmem:[#allocation10 + $0x1c4] sm:$0xf]
    %v384 = vld [vmem:[#allocation10 + $0x1c8] sm:$0xff]
    %v385 = vld [vmem:[#allocation10 + $0x1d0] sm:$0xf]
    %v386 = vld [vmem:[#allocation10 + $0x1d4] sm:$0xff]
    %v387 = vld [vmem:[#allocation10 + $0x1dc] sm:$0xf]
    %v388 = vld [vmem:[#allocation10 + $0x1e0] sm:$0xff]
    %v389 = vld [vmem:[#allocation10 + $0x1e8] sm:$0xf]
    %v390 = vld [vmem:[#allocation10 + $0x1ec] sm:$0xff]
    %v391 = vld [vmem:[#allocation10 + $0x1f4] sm:$0xf]
    %v392 = vld [vmem:[#allocation10 + $0x1f8] sm:$0xff]
    %v393 = vld [vmem:[#allocation10 + $0x200] sm:$0xf]
    %v394 = vld [vmem:[#allocation10 + $0x204] sm:$0xff]
    %v395 = vld [vmem:[#allocation10 + $0x20c] sm:$0xf]
    %v396 = vld [vmem:[#allocation10 + $0x210] sm:$0xff]
    %v397 = vld [vmem:[#allocation10 + $0x218] sm:$0xf]
    %v398 = vld [vmem:[#allocation10 + $0x21c] sm:$0xff]
    %v399 = vld [vmem:[#allocation10 + $0x224] sm:$0xf]
    %v400 = vld [vmem:[#allocation10 + $0x228] sm:$0xff]
    %v401 = vld [vmem:[#allocation10 + $0x230] sm:$0xf]
    %v402 = vld [vmem:[#allocation10 + $0x234] sm:$0xff]
    %v403 = vld [vmem:[#allocation10 + $0x23c] sm:$0xf]
    %v404 = vld [vmem:[#allocation10 + $0x240] sm:$0xff]
    %v405 = vld [vmem:[#allocation10 + $0x248] sm:$0xf]
    %v406 = vld [vmem:[#allocation10 + $0x24c] sm:$0xff]
    %v407 = vld [vmem:[#allocation10 + $0x254] sm:$0xf]
    %v408 = vld [vmem:[#allocation10 + $0x258] sm:$0xff]
    %v409 = vld [vmem:[#allocation10 + $0x260] sm:$0xf]
    %v410 = vld [vmem:[#allocation10 + $0x264] sm:$0xff]
    %v411 = vld [vmem:[#allocation10 + $0x26c] sm:$0xf]
    %v412 = vld [vmem:[#allocation10 + $0x270] sm:$0xff]
    %v413 = vld [vmem:[#allocation10 + $0x278] sm:$0xf]
    %v414 = vld [vmem:[#allocation10 + $0x27c] sm:$0xff]
    %v415 = vld [vmem:[#allocation10 + $0x284] sm:$0xf]
    %v416 = vld [vmem:[#allocation10 + $0x288] sm:$0xff]
    %v417 = vld [vmem:[#allocation10 + $0x290] sm:$0xf]
    %v418 = vld [vmem:[#allocation10 + $0x294] sm:$0xff]
    %v419 = vld [vmem:[#allocation10 + $0x29c] sm:$0xf]
    %v420 = vld [vmem:[#allocation10 + $0x2a0] sm:$0xff]
    %v421 = vld [vmem:[#allocation10 + $0x2a8] sm:$0xf]
    %v422 = vld [vmem:[#allocation10 + $0x2ac] sm:$0xff]
    %v423 = vld [vmem:[#allocation10 + $0x2b4] sm:$0xf]
    %v424 = vld [vmem:[#allocation10 + $0x2b8] sm:$0xff]
    %v425 = vld [vmem:[#allocation10 + $0x2c0] sm:$0xf]
    %v426 = vld [vmem:[#allocation10 + $0x2c4] sm:$0xff]
    %v427 = vld [vmem:[#allocation10 + $0x2cc] sm:$0xf]
    %v428 = vld [vmem:[#allocation10 + $0x2d0] sm:$0xff]
    %v429 = vld [vmem:[#allocation10 + $0x2d8] sm:$0xf]
    %v430 = vld [vmem:[#allocation10 + $0x2dc] sm:$0xff]
    %v431 = vld [vmem:[#allocation10 + $0x2e4] sm:$0xf]
    %v432 = vld [vmem:[#allocation10 + $0x2e8] sm:$0xff]
    %v433 = vld [vmem:[#allocation10 + $0x2f0] sm:$0xf]
    %v434 = vld [vmem:[#allocation10 + $0x2f4] sm:$0xff]
    %v435 = vld [vmem:[#allocation10 + $0x2fc] sm:$0xf]
    %v436 = vld [vmem:[%s6] sm:$0x7]
    %v438 = vperm.slane %v436, 0
    %v439 = vperm.slane %v436, 1
    %v440 = vperm.slane %v436, 2
    %v572 = vunpack.c.l.b16 %v308
    %v573 = vunpack.c.h.b16 %v308
    %v574 = vunpack.c.l.b16 %v309
    %v575 = vunpack.c.l.b16 %v310
    %v576 = vunpack.c.h.b16 %v310
    %v577 = vunpack.c.l.b16 %v311
    %v578 = vunpack.c.l.b16 %v312
    %v579 = vunpack.c.h.b16 %v312
    %v580 = vunpack.c.l.b16 %v313
    %v581 = vunpack.c.l.b16 %v314
    %v582 = vunpack.c.h.b16 %v314
    %v583 = vunpack.c.l.b16 %v315
    %v584 = vunpack.c.l.b16 %v316
    %v585 = vunpack.c.h.b16 %v316
    %v586 = vunpack.c.l.b16 %v317
    %v587 = vunpack.c.l.b16 %v318
    %v588 = vunpack.c.h.b16 %v318
    %v589 = vunpack.c.l.b16 %v319
    %v590 = vunpack.c.l.b16 %v320
    %v591 = vunpack.c.h.b16 %v320
    %v592 = vunpack.c.l.b16 %v321
    %v593 = vunpack.c.l.b16 %v322
    %v594 = vunpack.c.h.b16 %v322
    %v595 = vunpack.c.l.b16 %v323
    %v596 = vunpack.c.l.b16 %v324
    %v597 = vunpack.c.h.b16 %v324
    %v598 = vunpack.c.l.b16 %v325
    %v599 = vunpack.c.l.b16 %v326
    %v600 = vunpack.c.h.b16 %v326
    %v601 = vunpack.c.l.b16 %v327
    %v602 = vunpack.c.l.b16 %v328
    %v603 = vunpack.c.h.b16 %v328
    %v604 = vunpack.c.l.b16 %v329
    %v605 = vunpack.c.l.b16 %v330
    %v606 = vunpack.c.h.b16 %v330
    %v607 = vunpack.c.l.b16 %v331
    %v608 = vunpack.c.l.b16 %v332
    %v609 = vunpack.c.h.b16 %v332
    %v610 = vunpack.c.l.b16 %v333
    %v611 = vunpack.c.l.b16 %v334
    %v612 = vunpack.c.h.b16 %v334
    %v613 = vunpack.c.l.b16 %v335
    %v614 = vunpack.c.l.b16 %v336
    %v615 = vunpack.c.h.b16 %v336
    %v616 = vunpack.c.l.b16 %v337
    %v617 = vunpack.c.l.b16 %v338
    %v618 = vunpack.c.h.b16 %v338
    %v619 = vunpack.c.l.b16 %v339
    %v620 = vunpack.c.l.b16 %v340
    %v621 = vunpack.c.h.b16 %v340
    %v622 = vunpack.c.l.b16 %v341
    %v623 = vunpack.c.l.b16 %v342
    %v624 = vunpack.c.h.b16 %v342
    %v625 = vunpack.c.l.b16 %v343
    %v626 = vunpack.c.l.b16 %v344
    %v627 = vunpack.c.h.b16 %v344
    %v628 = vunpack.c.l.b16 %v345
    %v629 = vunpack.c.l.b16 %v346
    %v630 = vunpack.c.h.b16 %v346
    %v631 = vunpack.c.l.b16 %v347
    %v632 = vunpack.c.l.b16 %v348
    %v633 = vunpack.c.h.b16 %v348
    %v634 = vunpack.c.l.b16 %v349
    %v635 = vunpack.c.l.b16 %v350
    %v636 = vunpack.c.h.b16 %v350
    %v637 = vunpack.c.l.b16 %v351
    %v638 = vunpack.c.l.b16 %v352
    %v639 = vunpack.c.h.b16 %v352
    %v640 = vunpack.c.l.b16 %v353
    %v641 = vunpack.c.l.b16 %v354
    %v642 = vunpack.c.h.b16 %v354
    %v643 = vunpack.c.l.b16 %v355
    %v644 = vunpack.c.l.b16 %v356
    %v645 = vunpack.c.h.b16 %v356
    %v646 = vunpack.c.l.b16 %v357
    %v647 = vunpack.c.l.b16 %v358
    %v648 = vunpack.c.h.b16 %v358
    %v649 = vunpack.c.l.b16 %v359
    %v650 = vunpack.c.l.b16 %v360
    %v651 = vunpack.c.h.b16 %v360
    %v652 = vunpack.c.l.b16 %v361
    %v653 = vunpack.c.l.b16 %v362
    %v654 = vunpack.c.h.b16 %v362
    %v655 = vunpack.c.l.b16 %v363
    %v656 = vunpack.c.l.b16 %v364
    %v657 = vunpack.c.h.b16 %v364
    %v658 = vunpack.c.l.b16 %v365
    %v659 = vunpack.c.l.b16 %v366
    %v660 = vunpack.c.h.b16 %v366
    %v661 = vunpack.c.l.b16 %v367
    %v662 = vunpack.c.l.b16 %v368
    %v663 = vunpack.c.h.b16 %v368
    %v664 = vunpack.c.l.b16 %v369
    %v665 = vunpack.c.l.b16 %v370
    %v666 = vunpack.c.h.b16 %v370
    %v667 = vunpack.c.l.b16 %v371
    %v668 = vunpack.c.l.b16 %v372
    %v669 = vunpack.c.h.b16 %v372
    %v670 = vunpack.c.l.b16 %v373
    %v671 = vunpack.c.l.b16 %v374
    %v672 = vunpack.c.h.b16 %v374
    %v673 = vunpack.c.l.b16 %v375
    %v674 = vunpack.c.l.b16 %v376
    %v675 = vunpack.c.h.b16 %v376
    %v676 = vunpack.c.l.b16 %v377
    %v677 = vunpack.c.l.b16 %v378
    %v678 = vunpack.c.h.b16 %v378
    %v679 = vunpack.c.l.b16 %v379
    %v680 = vunpack.c.l.b16 %v380
    %v681 = vunpack.c.h.b16 %v380
    %v682 = vunpack.c.l.b16 %v381
    %v683 = vunpack.c.l.b16 %v382
    %v684 = vunpack.c.h.b16 %v382
    %v685 = vunpack.c.l.b16 %v383
    %v686 = vunpack.c.l.b16 %v384
    %v687 = vunpack.c.h.b16 %v384
    %v688 = vunpack.c.l.b16 %v385
    %v689 = vunpack.c.l.b16 %v386
    %v690 = vunpack.c.h.b16 %v386
    %v691 = vunpack.c.l.b16 %v387
    %v692 = vunpack.c.l.b16 %v388
    %v693 = vunpack.c.h.b16 %v388
    %v694 = vunpack.c.l.b16 %v389
    %v695 = vunpack.c.l.b16 %v390
    %v696 = vunpack.c.h.b16 %v390
    %v697 = vunpack.c.l.b16 %v391
    %v698 = vunpack.c.l.b16 %v392
    %v699 = vunpack.c.h.b16 %v392
    %v700 = vunpack.c.l.b16 %v393
    %v701 = vunpack.c.l.b16 %v394
    %v702 = vunpack.c.h.b16 %v394
    %v703 = vunpack.c.l.b16 %v395
    %v704 = vunpack.c.l.b16 %v396
    %v705 = vunpack.c.h.b16 %v396
    %v706 = vunpack.c.l.b16 %v397
    %v707 = vunpack.c.l.b16 %v398
    %v708 = vunpack.c.h.b16 %v398
    %v709 = vunpack.c.l.b16 %v399
    %v710 = vunpack.c.l.b16 %v400
    %v711 = vunpack.c.h.b16 %v400
    %v712 = vunpack.c.l.b16 %v401
    %v713 = vunpack.c.l.b16 %v402
    %v714 = vunpack.c.h.b16 %v402
    %v715 = vunpack.c.l.b16 %v403
    %v716 = vunpack.c.l.b16 %v404
    %v717 = vunpack.c.h.b16 %v404
    %v718 = vunpack.c.l.b16 %v405
    %v719 = vunpack.c.l.b16 %v406
    %v720 = vunpack.c.h.b16 %v406
    %v721 = vunpack.c.l.b16 %v407
    %v722 = vunpack.c.l.b16 %v408
    %v723 = vunpack.c.h.b16 %v408
    %v724 = vunpack.c.l.b16 %v409
    %v725 = vunpack.c.l.b16 %v410
    %v726 = vunpack.c.h.b16 %v410
    %v727 = vunpack.c.l.b16 %v411
    %v728 = vunpack.c.l.b16 %v412
    %v729 = vunpack.c.h.b16 %v412
    %v730 = vunpack.c.l.b16 %v413
    %v731 = vunpack.c.l.b16 %v414
    %v732 = vunpack.c.h.b16 %v414
    %v733 = vunpack.c.l.b16 %v415
    %v734 = vunpack.c.l.b16 %v416
    %v735 = vunpack.c.h.b16 %v416
    %v736 = vunpack.c.l.b16 %v417
    %v737 = vunpack.c.l.b16 %v418
    %v738 = vunpack.c.h.b16 %v418
    %v739 = vunpack.c.l.b16 %v419
    %v740 = vunpack.c.l.b16 %v420
    %v741 = vunpack.c.h.b16 %v420
    %v742 = vunpack.c.l.b16 %v421
    %v743 = vunpack.c.l.b16 %v422
    %v744 = vunpack.c.h.b16 %v422
    %v745 = vunpack.c.l.b16 %v423
    %v746 = vunpack.c.l.b16 %v424
    %v747 = vunpack.c.h.b16 %v424
    %v748 = vunpack.c.l.b16 %v425
    %v749 = vunpack.c.l.b16 %v426
    %v750 = vunpack.c.h.b16 %v426
    %v751 = vunpack.c.l.b16 %v427
    %v752 = vunpack.c.l.b16 %v428
    %v753 = vunpack.c.h.b16 %v428
    %v754 = vunpack.c.l.b16 %v429
    %v755 = vunpack.c.l.b16 %v430
    %v756 = vunpack.c.h.b16 %v430
    %v757 = vunpack.c.l.b16 %v431
    %v758 = vunpack.c.l.b16 %v432
    %v759 = vunpack.c.h.b16 %v432
    %v760 = vunpack.c.l.b16 %v433
    %v761 = vunpack.c.l.b16 %v434
    %v762 = vunpack.c.h.b16 %v434
    %v763 = vunpack.c.l.b16 %v435
    %v764 = vpack.c.b16 %v575, %v572
    %v765 = vpack.c.b16 %v576, %v573
    %v766 = vpack.c.b16 %v577, %v574
    %v767 = vpack.c.b16 %v581, %v578
    %v768 = vpack.c.b16 %v582, %v579
    %v769 = vpack.c.b16 %v583, %v580
    %v770 = vpack.c.b16 %v587, %v584
    %v771 = vpack.c.b16 %v588, %v585
    %v772 = vpack.c.b16 %v589, %v586
    %v773 = vpack.c.b16 %v593, %v590
    %v774 = vpack.c.b16 %v594, %v591
    %v775 = vpack.c.b16 %v595, %v592
    %v776 = vpack.c.b16 %v599, %v596
    %v777 = vpack.c.b16 %v600, %v597
    %v778 = vpack.c.b16 %v601, %v598
    %v779 = vpack.c.b16 %v605, %v602
    %v780 = vpack.c.b16 %v606, %v603
    %v781 = vpack.c.b16 %v607, %v604
    %v782 = vpack.c.b16 %v611, %v608
    %v783 = vpack.c.b16 %v612, %v609
    %v784 = vpack.c.b16 %v613, %v610
    %v785 = vpack.c.b16 %v617, %v614
    %v786 = vpack.c.b16 %v618, %v615
    %v787 = vpack.c.b16 %v619, %v616
    %v788 = vpack.c.b16 %v623, %v620
    %v789 = vpack.c.b16 %v624, %v621
    %v790 = vpack.c.b16 %v625, %v622
    %v791 = vpack.c.b16 %v629, %v626
    %v792 = vpack.c.b16 %v630, %v627
    %v793 = vpack.c.b16 %v631, %v628
    %v794 = vpack.c.b16 %v635, %v632
    %v795 = vpack.c.b16 %v636, %v633
    %v796 = vpack.c.b16 %v637, %v634
    %v797 = vpack.c.b16 %v641, %v638
    %v798 = vpack.c.b16 %v642, %v639
    %v799 = vpack.c.b16 %v643, %v640
    %v800 = vpack.c.b16 %v647, %v644
    %v801 = vpack.c.b16 %v648, %v645
    %v802 = vpack.c.b16 %v649, %v646
    %v803 = vpack.c.b16 %v653, %v650
    %v804 = vpack.c.b16 %v654, %v651
    %v805 = vpack.c.b16 %v655, %v652
    %v806 = vpack.c.b16 %v659, %v656
    %v807 = vpack.c.b16 %v660, %v657
    %v808 = vpack.c.b16 %v661, %v658
    %v809 = vpack.c.b16 %v665, %v662
    %v810 = vpack.c.b16 %v666, %v663
    %v811 = vpack.c.b16 %v667, %v664
    %v812 = vpack.c.b16 %v671, %v668
    %v813 = vpack.c.b16 %v672, %v669
    %v814 = vpack.c.b16 %v673, %v670
    %v815 = vpack.c.b16 %v677, %v674
    %v816 = vpack.c.b16 %v678, %v675
    %v817 = vpack.c.b16 %v679, %v676
    %v818 = vpack.c.b16 %v683, %v680
    %v819 = vpack.c.b16 %v684, %v681
    %v820 = vpack.c.b16 %v685, %v682
    %v821 = vpack.c.b16 %v689, %v686
    %v822 = vpack.c.b16 %v690, %v687
    %v823 = vpack.c.b16 %v691, %v688
    %v824 = vpack.c.b16 %v695, %v692
    %v825 = vpack.c.b16 %v696, %v693
    %v826 = vpack.c.b16 %v697, %v694
    %v827 = vpack.c.b16 %v701, %v698
    %v828 = vpack.c.b16 %v702, %v699
    %v829 = vpack.c.b16 %v703, %v700
    %v830 = vpack.c.b16 %v707, %v704
    %v831 = vpack.c.b16 %v708, %v705
    %v832 = vpack.c.b16 %v709, %v706
    %v833 = vpack.c.b16 %v713, %v710
    %v834 = vpack.c.b16 %v714, %v711
    %v835 = vpack.c.b16 %v715, %v712
    %v836 = vpack.c.b16 %v719, %v716
    %v837 = vpack.c.b16 %v720, %v717
    %v838 = vpack.c.b16 %v721, %v718
    %v839 = vpack.c.b16 %v725, %v722
    %v840 = vpack.c.b16 %v726, %v723
    %v841 = vpack.c.b16 %v727, %v724
    %v842 = vpack.c.b16 %v731, %v728
    %v843 = vpack.c.b16 %v732, %v729
    %v844 = vpack.c.b16 %v733, %v730
    %v845 = vpack.c.b16 %v737, %v734
    %v846 = vpack.c.b16 %v738, %v735
    %v847 = vpack.c.b16 %v739, %v736
    %v848 = vpack.c.b16 %v743, %v740
    %v849 = vpack.c.b16 %v744, %v741
    %v850 = vpack.c.b16 %v745, %v742
    %v851 = vpack.c.b16 %v749, %v746
    %v852 = vpack.c.b16 %v750, %v747
    %v853 = vpack.c.b16 %v751, %v748
    %v854 = vpack.c.b16 %v755, %v752
    %v855 = vpack.c.b16 %v756, %v753
    %v856 = vpack.c.b16 %v757, %v754
    %v857 = vpack.c.b16 %v761, %v758
    %v858 = vpack.c.b16 %v762, %v759
    %v859 = vpack.c.b16 %v763, %v760
    %956 = vmatpush.bf16.msra.mxu0 %v785
    %957 = vmatpush.bf16.msra.mxu0 %v782
    %958 = vmatpush.bf16.msra.mxu0 %v779
    %959 = vmatpush.bf16.msra.mxu0 %v776
    %960 = vmatpush.bf16.msra.mxu0 %v773
    %961 = vmatpush.bf16.msra.mxu0 %v770
    %962 = vmatpush.bf16.msra.mxu0 %v767
    %963 = vmatpush.bf16.msra.mxu0 %v764
    %964 = vmatmul.bf16.gmra.mxu0 %v304
    %v965 = vpop.f32.mrf.mxu0
    %v966 = vadd.f32 %v438, %v965
    %v967 = vpop.f32.mrf.mxu0
    %968 = vdwg.mxu0
    %969 = vmatpush.bf16.msra.mxu0 %v809
    %970 = vmatpush.bf16.msra.mxu0 %v806
    %971 = vmatpush.bf16.msra.mxu0 %v803
    %972 = vmatpush.bf16.msra.mxu0 %v800
    %973 = vmatpush.bf16.msra.mxu0 %v797
    %974 = vmatpush.bf16.msra.mxu0 %v794
    %975 = vmatpush.bf16.msra.mxu0 %v791
    %976 = vmatpush.bf16.msra.mxu0 %v788
    %977 = vmatmul.bf16.gmra.mxu0 %v305
    %v978 = vpop.f32.mrf.mxu0
    %v979 = vadd.f32 %v966, %v978
    %v980 = vpop.f32.mrf.mxu0
    %981 = vdwg.mxu0
    %982 = vmatpush.bf16.msra.mxu0 %v833
    %983 = vmatpush.bf16.msra.mxu0 %v830
    %984 = vmatpush.bf16.msra.mxu0 %v827
    %985 = vmatpush.bf16.msra.mxu0 %v824
    %986 = vmatpush.bf16.msra.mxu0 %v821
    %987 = vmatpush.bf16.msra.mxu0 %v818
    %988 = vmatpush.bf16.msra.mxu0 %v815
    %989 = vmatpush.bf16.msra.mxu0 %v812
    %990 = vmatmul.bf16.gmra.mxu0 %v306
    %v991 = vpop.f32.mrf.mxu0
    %v992 = vadd.f32 %v979, %v991
    %v993 = vpop.f32.mrf.mxu0
    %994 = vdwg.mxu0
    %995 = vmatpush.bf16.msra.mxu0 %v857
    %996 = vmatpush.bf16.msra.mxu0 %v854
    %997 = vmatpush.bf16.msra.mxu0 %v851
    %998 = vmatpush.bf16.msra.mxu0 %v848
    %999 = vmatpush.bf16.msra.mxu0 %v845
    %1000 = vmatpush.bf16.msra.mxu0 %v842
    %1001 = vmatpush.bf16.msra.mxu0 %v839
    %1002 = vmatpush.bf16.msra.mxu0 %v836
    %1003 = vmatmul.bf16.gmra.mxu0 %v307
    %v1004 = vpop.f32.mrf.mxu0
    %v1005 = vadd.f32 %v992, %v1004
    %v1006 = vpop.f32.mrf.mxu0
    %1007 = vdwg.mxu0
    %1008 = vmatpush.bf16.msra.mxu0 %v786
    %1009 = vmatpush.bf16.msra.mxu0 %v783
    %1010 = vmatpush.bf16.msra.mxu0 %v780
    %1011 = vmatpush.bf16.msra.mxu0 %v777
    %1012 = vmatpush.bf16.msra.mxu0 %v774
    %1013 = vmatpush.bf16.msra.mxu0 %v771
    %1014 = vmatpush.bf16.msra.mxu0 %v768
    %1015 = vmatpush.bf16.msra.mxu0 %v765
    %1016 = vmatmul.bf16.gmra.mxu0 %v304
    %v1017 = vpop.f32.mrf.mxu0
    %v1018 = vadd.f32 %v439, %v1017
    %v1019 = vpop.f32.mrf.mxu0
    %1020 = vdwg.mxu0
    %1021 = vmatpush.bf16.msra.mxu0 %v810
    %1022 = vmatpush.bf16.msra.mxu0 %v807
    %1023 = vmatpush.bf16.msra.mxu0 %v804
    %1024 = vmatpush.bf16.msra.mxu0 %v801
    %1025 = vmatpush.bf16.msra.mxu0 %v798
    %1026 = vmatpush.bf16.msra.mxu0 %v795
    %1027 = vmatpush.bf16.msra.mxu0 %v792
    %1028 = vmatpush.bf16.msra.mxu0 %v789
    %1029 = vmatmul.bf16.gmra.mxu0 %v305
    %v1030 = vpop.f32.mrf.mxu0
    %v1031 = vadd.f32 %v1018, %v1030
    %v1032 = vpop.f32.mrf.mxu0
    %1033 = vdwg.mxu0
    %1034 = vmatpush.bf16.msra.mxu0 %v834
    %1035 = vmatpush.bf16.msra.mxu0 %v831
    %1036 = vmatpush.bf16.msra.mxu0 %v828
    %1037 = vmatpush.bf16.msra.mxu0 %v825
    %1038 = vmatpush.bf16.msra.mxu0 %v822
    %1039 = vmatpush.bf16.msra.mxu0 %v819
    %1040 = vmatpush.bf16.msra.mxu0 %v816
    %1041 = vmatpush.bf16.msra.mxu0 %v813
    %1042 = vmatmul.bf16.gmra.mxu0 %v306
    %v1043 = vpop.f32.mrf.mxu0
    %v1044 = vadd.f32 %v1031, %v1043
    %v1045 = vpop.f32.mrf.mxu0
    %1046 = vdwg.mxu0
    %1047 = vmatpush.bf16.msra.mxu0 %v858
    %1048 = vmatpush.bf16.msra.mxu0 %v855
    %1049 = vmatpush.bf16.msra.mxu0 %v852
    %1050 = vmatpush.bf16.msra.mxu0 %v849
    %1051 = vmatpush.bf16.msra.mxu0 %v846
    %1052 = vmatpush.bf16.msra.mxu0 %v843
    %1053 = vmatpush.bf16.msra.mxu0 %v840
    %1054 = vmatpush.bf16.msra.mxu0 %v837
    %1055 = vmatmul.bf16.gmra.mxu0 %v307
    %v1056 = vpop.f32.mrf.mxu0
    %v1057 = vadd.f32 %v1044, %v1056
    %v1058 = vpop.f32.mrf.mxu0
    %1059 = vdwg.mxu0
    %1060 = vmatpush.bf16.msra.mxu0 %v787
    %1061 = vmatpush.bf16.msra.mxu0 %v784
    %1062 = vmatpush.bf16.msra.mxu0 %v781
    %1063 = vmatpush.bf16.msra.mxu0 %v778
    %1064 = vmatpush.bf16.msra.mxu0 %v775
    %1065 = vmatpush.bf16.msra.mxu0 %v772
    %1066 = vmatpush.bf16.msra.mxu0 %v769
    %1067 = vmatpush.bf16.msra.mxu0 %v766
    %1068 = vmatmul.bf16.gmra.mxu0 %v304
    %v1069 = vpop.f32.mrf.mxu0
    %v1070 = vadd.f32 %v440, %v1069
    %v1071 = vpop.f32.mrf.mxu0
    %1072 = vdwg.mxu0
    %1073 = vmatpush.bf16.msra.mxu0 %v811
    %1074 = vmatpush.bf16.msra.mxu0 %v808
    %1075 = vmatpush.bf16.msra.mxu0 %v805
    %1076 = vmatpush.bf16.msra.mxu0 %v802
    %1077 = vmatpush.bf16.msra.mxu0 %v799
    %1078 = vmatpush.bf16.msra.mxu0 %v796
    %1079 = vmatpush.bf16.msra.mxu0 %v793
    %1080 = vmatpush.bf16.msra.mxu0 %v790
    %1081 = vmatmul.bf16.gmra.mxu0 %v305
    %v1082 = vpop.f32.mrf.mxu0
    %v1083 = vadd.f32 %v1070, %v1082
    %v1084 = vpop.f32.mrf.mxu0
    %1085 = vdwg.mxu0
    %1086 = vmatpush.bf16.msra.mxu0 %v835
    %1087 = vmatpush.bf16.msra.mxu0 %v832
    %1088 = vmatpush.bf16.msra.mxu0 %v829
    %1089 = vmatpush.bf16.msra.mxu0 %v826
    %1090 = vmatpush.bf16.msra.mxu0 %v823
    %1091 = vmatpush.bf16.msra.mxu0 %v820
    %1092 = vmatpush.bf16.msra.mxu0 %v817
    %1093 = vmatpush.bf16.msra.mxu0 %v814
    %1094 = vmatmul.bf16.gmra.mxu0 %v306
    %v1095 = vpop.f32.mrf.mxu0
    %v1096 = vadd.f32 %v1083, %v1095
    %v1097 = vpop.f32.mrf.mxu0
    %1098 = vdwg.mxu0
    %1099 = vmatpush.bf16.msra.mxu0 %v859
    %1100 = vmatpush.bf16.msra.mxu0 %v856
    %1101 = vmatpush.bf16.msra.mxu0 %v853
    %1102 = vmatpush.bf16.msra.mxu0 %v850
    %1103 = vmatpush.bf16.msra.mxu0 %v847
    %1104 = vmatpush.bf16.msra.mxu0 %v844
    %1105 = vmatpush.bf16.msra.mxu0 %v841
    %1106 = vmatpush.bf16.msra.mxu0 %v838
    %1107 = vmatmul.bf16.gmra.mxu0 %v307
    %v1108 = vpop.f32.mrf.mxu0
    %v1109 = vadd.f32 %v1096, %v1108
    %v1110 = vpop.f32.mrf.mxu0
    %1111 = vdwg.mxu0
    %v1112 = vmax.f32 %v1005, 0.0
    %v1113 = vmax.f32 %v1057, 0.0
    %v1114 = vmax.f32 %v1109, 0.0
    %v1115 = vld [vmem:[#allocation11] sm:$0x7]
    %v1117 = vperm.slane %v1115, 0
    %v1118 = vperm.slane %v1115, 1
    %v1119 = vperm.slane %v1115, 2
    %v1123 = vmul.f32 %v1112, %v1117
    %v1124 = vmul.f32 %v1113, %v1118
    %v1125 = vmul.f32 %v1114, %v1119
    %v1126 = vadd.f32 %v1123, %v1124
    %v1127 = vadd.f32 %v1126, %v1125
    %1128 = vadd.xlane.f32.xlu0 %v1127
    %v1129 = vpop.xlane.xlu0 %1128
    %v1130 = vld [vmem:[#allocation2] sm:$0x1]
    %v1132 = vperm.slane %v1130, 0
    %v1134 = vadd.f32 %v1129, %v1132
    %vm1135 = vcmask 7168
    %1136 = vst.msk [vmem:[%s9] sm:$0xff] %vm1135, %v1134
    // Predicated region
    $region62: #{tpu_custom_call.1} parent=1 // pred_check
      _
    $region63: #{tpu_custom_call.1} parent=1 // pred_check_branch
      %1138 = sbr.rel (0) target = $region65
    $region64: #{tpu_custom_call.1} parent=1 // pred_region
      _
    $region65: #{tpu_custom_call.1} parent=1 // pred_fallthru
      _
    // Predicated region
    $region66: #{tpu_custom_call.1} parent=1 // pred_check
      _
    $region67: #{tpu_custom_call.1} parent=1 // pred_check_branch
      %1140 = sbr.rel (0) target = $region69
    $region68: #{tpu_custom_call.1} parent=1 // pred_region
      _
    $region69: #{tpu_custom_call.1} parent=1 // pred_fallthru
      _
    %1141 = vsyncpa [#allocation4], 1
    %1142 = vsyncpa [#allocation6], 1
    %1143 = vsyncpa [#allocation9], 1
    %1144 = vsyncpa [#allocation12], 1

</llo_original>
